<compile_context>
chip_gen: v7x
topology: tpu7x:2x2x1
jax: 0.10.0
libtpu: 0.0.40
codegen_flags: <defaults>
</compile_context>

<pallas_src>
import jax
import jax.numpy as jnp
from jax import lax
from jax.experimental import pallas as pl
from jax.experimental.pallas import tpu as pltpu

CHUNK = 512  # lanes processed per inner-loop step (bounds vreg live set)


def mlp_kernel(x_ref, w1_ref, b1_ref, w2_ref, b2_ref, w3_ref, b3_ref, o_ref):
    """One row-tile of the MLP, computed with samples on the lane axis.

    x_ref : (tm, F)   f32    samples on sublanes, features on lanes
    w1_ref: (h1, F)   bf16   PyTorch [out, in] layout, used directly
    b1_ref: (h1, 1)   f32
    w2_ref: (h2, h1)  bf16
    b2_ref: (h2, 1)   f32
    w3_ref: (h2, 1)   f32    out.weight as a column
    b3_ref: (1, 1)    f32
    o_ref : (1, tm)   f32    lane-dense scores (samples on lanes)
    """
    tm = x_ref.shape[0]
    num_chunks = tm // CHUNK  # static

    def body(c, carry):
        i = pl.multiple_of(c * CHUNK, CHUNK)
        # (CHUNK, F) slice of the resident x tile, cast to bf16 in-register.
        xc = x_ref[pl.ds(i, CHUNK), :].astype(jnp.bfloat16)

        # Layer 1: contract both feature dims (w1 (h1,F) x xc (CHUNK,F)^T)
        # -> (h1, CHUNK); bf16 MXU, f32 accumulation, no materialized transpose.
        h1 = lax.dot_general(
            w1_ref[...], xc,
            dimension_numbers=(((1,), (1,)), ((), ())),
            preferred_element_type=jnp.float32)
        h1 = jnp.maximum(h1 + b1_ref[...], 0.0)            # f32 bias + ReLU (VPU)

        # Layer 2: (h2, h1) @ (h1, CHUNK) -> (h2, CHUNK); single-pass bf16 MXU.
        h2 = jnp.dot(w2_ref[...], h1.astype(jnp.bfloat16),
                     preferred_element_type=jnp.float32)
        h2 = jnp.maximum(h2 + b2_ref[...], 0.0)

        # Output layer (width 1): VPU multiply + sublane (XLU) reduction instead
        # of a 1-wide MXU matmul; result is naturally lane-dense (1, CHUNK).
        o = jnp.sum(h2 * w3_ref[...], axis=0, keepdims=True) + b3_ref[...]
        o_ref[:, pl.ds(i, CHUNK)] = o.astype(o_ref.dtype)
        return carry

    lax.fori_loop(0, num_chunks, body, 0)


def _round_up(v, m):
    return (v + m - 1) // m * m


def net_forward(x, params, *, tm_max=8192):
    """x: [N, n_feature] f32; returns [N, 1] f32 scores (matches Net.forward)."""
    n, f = x.shape
    w1 = params["w1"].astype(jnp.bfloat16)   # (h1, F)  bf16 MXU operand
    b1 = params["b1"]                        # (h1, 1)  f32
    w2 = params["w2"].astype(jnp.bfloat16)   # (h2, h1) bf16 MXU operand
    b2 = params["b2"]                        # (h2, 1)  f32
    w3 = params["w3"]                        # (h2, 1)  f32
    b3 = params["b3"]                        # (1, 1)   f32

    # Row-tile size: big enough to amortize per-grid-step overhead, capped so
    # the "parallel" grid axis keeps >=2 steps when the batch allows (v7x 2 TC).
    tm = min(tm_max, _round_up(pl.cdiv(n, 2), CHUNK))
    tm = max(tm, CHUNK)
    num_tiles = pl.cdiv(n, tm)

    # Weights / biases: full-array blocks with a constant index_map -> fetched
    # once and kept resident in VMEM across all row tiles.
    resident = lambda a: pl.BlockSpec(a.shape, lambda i: (0, 0))

    # Double-buffered x (<=1 MiB f32 at tm=8192) + tiny resident weights stay far
    # below every generation's scoped-VMEM default, so no vmem_limit_bytes needed.
    out = pl.pallas_call(
        mlp_kernel,
        out_shape=jax.ShapeDtypeStruct((1, n), jnp.float32),
        grid=(num_tiles,),
        in_specs=[
            pl.BlockSpec((tm, f), lambda i: (i, 0)),   # x row tile (pipelined)
            resident(w1), resident(b1),
            resident(w2), resident(b2),
            resident(w3), resident(b3),
        ],
        out_specs=pl.BlockSpec((1, tm), lambda i: (0, i)),  # lane-dense tile
        compiler_params=pltpu.CompilerParams(
            dimension_semantics=("parallel",)),
    )(x, w1, b1, w2, b2, w3, b3)

    # Free layout plumbing back to the nn.Linear(h2, 1) output shape.
    return out.reshape(n, 1)


def init_params(key, n_feature, h1_units, h2_units):
    """Deterministic synthetic init in PyTorch nn.Linear layout ([out, in])."""
    ks = jax.random.split(key, 6)
    w1 = jax.random.normal(ks[0], (h1_units, n_feature), jnp.float32) * 0.1
    b1 = jax.random.normal(ks[1], (h1_units,), jnp.float32) * 0.1
    w2 = jax.random.normal(ks[2], (h2_units, h1_units), jnp.float32) * 0.1
    b2 = jax.random.normal(ks[3], (h2_units,), jnp.float32) * 0.1
    w3 = jax.random.normal(ks[4], (1, h2_units), jnp.float32) * 0.1
    b3 = jax.random.normal(ks[5], (1,), jnp.float32) * 0.1
    return {
        "w1": w1,                      # (h1, F)  -- PyTorch layout, used as-is
        "b1": b1.reshape(-1, 1),       # (h1, 1)
        "w2": w2,                      # (h2, h1)
        "b2": b2.reshape(-1, 1),       # (h2, 1)
        "w3": w3.reshape(-1, 1),       # (h2, 1)  -- out.weight as a column
        "b3": b3.reshape(1, 1),        # (1, 1)
    }


def net_forward_ref(x, p):
    """Pure-JAX reference mirroring the kernel's in-kernel bf16 casts."""
    hp = jax.lax.Precision.HIGHEST
    f32 = jnp.float32
    xb = x.astype(jnp.bfloat16).astype(f32)
    w1 = p["w1"].astype(jnp.bfloat16).astype(f32)
    w2 = p["w2"].astype(jnp.bfloat16).astype(f32)
    h1 = jnp.maximum(jnp.dot(xb, w1.T, precision=hp) + p["b1"].T, 0.0)
    h1 = h1.astype(jnp.bfloat16).astype(f32)
    h2 = jnp.maximum(jnp.dot(h1, w2.T, precision=hp) + p["b2"].T, 0.0)
    return jnp.dot(h2, p["w3"], precision=hp) + p["b3"]


if __name__ == "__main__":
    # Shapes consistent with the module: n_feature=32, h1_units=64, h2_units=32.
    # batch=300 is not a multiple of the 512-row tile, exercising the
    # grid-overrun / masked-writeback path for the ragged last tile.
    n_feature, h1_units, h2_units = 32, 64, 32
    batch = 300

    key = jax.random.PRNGKey(0)
    kx, kp = jax.random.split(key)
    x = jax.random.normal(kx, (batch, n_feature), jnp.float32)
    params = init_params(kp, n_feature, h1_units, h2_units)

    out = net_forward(x, params)
    jax.block_until_ready(out)

    ref = net_forward_ref(x, params)
    assert out.shape == (batch, 1), out.shape
    max_err = float(jnp.max(jnp.abs(out - ref)))
    assert jnp.allclose(out, ref, atol=2e-3, rtol=2e-3), f"mismatch: {max_err}"

    print("KERNEL_OK")
</pallas_src>

<mosaic_0001>
module attributes {stable_mosaic.version = 11 : i64} {
  func.func @mlp_kernel(%arg0: i32, %arg1: memref<512x32xf32, #tpu.memory_space<vmem>>, %arg2: memref<64x32xbf16, #tpu.memory_space<vmem>>, %arg3: memref<64x1xf32, #tpu.memory_space<vmem>>, %arg4: memref<32x64xbf16, #tpu.memory_space<vmem>>, %arg5: memref<32x1xf32, #tpu.memory_space<vmem>>, %arg6: memref<32x1xf32, #tpu.memory_space<vmem>>, %arg7: memref<1x1xf32, #tpu.memory_space<vmem>>, %arg8: memref<1x512xf32, #tpu.memory_space<vmem>>) attributes {dimension_semantics = [#tpu.dimension_semantics<parallel>], iteration_bounds = array<i64: 1>, scalar_prefetch = 0 : i64, scratch_operands = 0 : i64, tpu.core_type = #tpu.core_type<tc>, window_params = [{transform_indices = @transform_0, window_bounds = array<i64: 512, 32>}, {pipeline_mode = #tpu.pipeline_mode<synchronous>, transform_indices = @transform_1, window_bounds = array<i64: 64, 32>}, {pipeline_mode = #tpu.pipeline_mode<synchronous>, transform_indices = @transform_2, window_bounds = array<i64: 64, 1>}, {pipeline_mode = #tpu.pipeline_mode<synchronous>, transform_indices = @transform_3, window_bounds = array<i64: 32, 64>}, {pipeline_mode = #tpu.pipeline_mode<synchronous>, transform_indices = @transform_4, window_bounds = array<i64: 32, 1>}, {pipeline_mode = #tpu.pipeline_mode<synchronous>, transform_indices = @transform_5, window_bounds = array<i64: 32, 1>}, {pipeline_mode = #tpu.pipeline_mode<synchronous>, transform_indices = @transform_6, window_bounds = array<i64: 1, 1>}, {transform_indices = @transform_7, window_bounds = array<i64: 1, 512>}]} {
    %c0_i32 = arith.constant 0 : i32
    %c512_i32 = arith.constant 512 : i32
    %0 = arith.muli %c0_i32, %c512_i32 : i32
    %1 = tpu.assume_multiple %0, 512 : i32
    %2 = arith.index_cast %1 : i32 to index
    %c0 = arith.constant 0 : index
    %3 = vector.load %arg1[%2, %c0] : memref<512x32xf32, #tpu.memory_space<vmem>>, vector<512x32xf32>
    %4 = arith.truncf %3 : vector<512x32xf32> to vector<512x32xbf16>
    %c0_0 = arith.constant 0 : index
    %c0_1 = arith.constant 0 : index
    %5 = vector.load %arg2[%c0_0, %c0_1] : memref<64x32xbf16, #tpu.memory_space<vmem>>, vector<64x32xbf16>
    %cst = arith.constant dense<0.000000e+00> : vector<64x512xf32>
    %6 = tpu.matmul %5, %4, %cst {dimension_numbers = #tpu.dot_dimension_numbers<[1], [1], [0], [0], [0, 0, 1, 0], [], []>} : vector<64x32xbf16>, vector<512x32xbf16>, vector<64x512xf32> -> vector<64x512xf32>
    %c0_2 = arith.constant 0 : index
    %c0_3 = arith.constant 0 : index
    %7 = vector.load %arg3[%c0_2, %c0_3] : memref<64x1xf32, #tpu.memory_space<vmem>>, vector<64x1xf32>
    %8 = vector.broadcast %7 : vector<64x1xf32> to vector<64x512xf32>
    %9 = arith.addf %6, %8 : vector<64x512xf32>
    %cst_4 = arith.constant 0.000000e+00 : f32
    %10 = vector.broadcast %cst_4 : f32 to vector<64x512xf32>
    %11 = arith.maximumf %9, %10 : vector<64x512xf32>
    %c0_5 = arith.constant 0 : index
    %c0_6 = arith.constant 0 : index
    %12 = vector.load %arg4[%c0_5, %c0_6] : memref<32x64xbf16, #tpu.memory_space<vmem>>, vector<32x64xbf16>
    %13 = arith.truncf %11 : vector<64x512xf32> to vector<64x512xbf16>
    %cst_7 = arith.constant dense<0.000000e+00> : vector<32x512xf32>
    %14 = tpu.matmul %12, %13, %cst_7 {dimension_numbers = #tpu.dot_dimension_numbers<[1], [0], [0], [1], [0, 0, 1, 1], [], []>} : vector<32x64xbf16>, vector<64x512xbf16>, vector<32x512xf32> -> vector<32x512xf32>
    %c0_8 = arith.constant 0 : index
    %c0_9 = arith.constant 0 : index
    %15 = vector.load %arg5[%c0_8, %c0_9] : memref<32x1xf32, #tpu.memory_space<vmem>>, vector<32x1xf32>
    %16 = vector.broadcast %15 : vector<32x1xf32> to vector<32x512xf32>
    %17 = arith.addf %14, %16 : vector<32x512xf32>
    %cst_10 = arith.constant 0.000000e+00 : f32
    %18 = vector.broadcast %cst_10 : f32 to vector<32x512xf32>
    %19 = arith.maximumf %17, %18 : vector<32x512xf32>
    %c0_11 = arith.constant 0 : index
    %c0_12 = arith.constant 0 : index
    %20 = vector.load %arg6[%c0_11, %c0_12] : memref<32x1xf32, #tpu.memory_space<vmem>>, vector<32x1xf32>
    %21 = vector.broadcast %20 : vector<32x1xf32> to vector<32x512xf32>
    %22 = arith.mulf %19, %21 : vector<32x512xf32>
    %cst_13 = arith.constant dense<0.000000e+00> : vector<512xf32>
    %23 = vector.multi_reduction <add>, %22, %cst_13 [0] : vector<32x512xf32> to vector<512xf32>
    %24 = vector.shape_cast %23 : vector<512xf32> to vector<1x512xf32>
    %c0_14 = arith.constant 0 : index
    %c0_15 = arith.constant 0 : index
    %25 = vector.load %arg7[%c0_14, %c0_15] : memref<1x1xf32, #tpu.memory_space<vmem>>, vector<1x1xf32>
    %26 = vector.broadcast %25 : vector<1x1xf32> to vector<1x512xf32>
    %27 = arith.addf %24, %26 : vector<1x512xf32>
    %c0_16 = arith.constant 0 : index
    %28 = arith.index_cast %1 : i32 to index
    %29 = vector.load %arg8[%c0_16, %28] : memref<1x512xf32, #tpu.memory_space<vmem>>, vector<1x512xf32>
    tpu.vector_store %arg8[%c0_16, %28], %27 {strides = array<i32>} : memref<1x512xf32, #tpu.memory_space<vmem>>, vector<1x512xf32>,
    %c1_i32 = arith.constant 1 : i32
    return
  }
  func.func @transform_0(%arg0: i32) -> (i32, i32) {
    %c0_i32 = arith.constant 0 : i32
    %c0_i32_0 = arith.constant 0 : i32
    return %arg0, %c0_i32 : i32, i32
  }
  func.func @transform_1(%arg0: i32) -> (i32, i32) {
    %c0_i32 = arith.constant 0 : i32
    %c0_i32_0 = arith.constant 0 : i32
    %c0_i32_1 = arith.constant 0 : i32
    return %c0_i32, %c0_i32_0 : i32, i32
  }
  func.func @transform_2(%arg0: i32) -> (i32, i32) {
    %c0_i32 = arith.constant 0 : i32
    %c0_i32_0 = arith.constant 0 : i32
    %c0_i32_1 = arith.constant 0 : i32
    return %c0_i32, %c0_i32_0 : i32, i32
  }
  func.func @transform_3(%arg0: i32) -> (i32, i32) {
    %c0_i32 = arith.constant 0 : i32
    %c0_i32_0 = arith.constant 0 : i32
    %c0_i32_1 = arith.constant 0 : i32
    return %c0_i32, %c0_i32_0 : i32, i32
  }
  func.func @transform_4(%arg0: i32) -> (i32, i32) {
    %c0_i32 = arith.constant 0 : i32
    %c0_i32_0 = arith.constant 0 : i32
    %c0_i32_1 = arith.constant 0 : i32
    return %c0_i32, %c0_i32_0 : i32, i32
  }
  func.func @transform_5(%arg0: i32) -> (i32, i32) {
    %c0_i32 = arith.constant 0 : i32
    %c0_i32_0 = arith.constant 0 : i32
    %c0_i32_1 = arith.constant 0 : i32
    return %c0_i32, %c0_i32_0 : i32, i32
  }
  func.func @transform_6(%arg0: i32) -> (i32, i32) {
    %c0_i32 = arith.constant 0 : i32
    %c0_i32_0 = arith.constant 0 : i32
    %c0_i32_1 = arith.constant 0 : i32
    return %c0_i32, %c0_i32_0 : i32, i32
  }
  func.func @transform_7(%arg0: i32) -> (i32, i32) {
    %c0_i32 = arith.constant 0 : i32
    %c0_i32_0 = arith.constant 0 : i32
    return %c0_i32, %arg0 : i32, i32
  }
}

</mosaic_0001>

<llo_original>
// kernel: tpu_custom_call.1
$region0: #{tpu_custom_call.1}
  #allocation0 [shape = 'u32[]', space=smem, size = 0x4, offset = 0x4, fixed_abs, tag = 'smem constant byte address 0x4 - core index']
  #allocation1 [shape = 'u32[144,128]{1,0:T(1,128)}', space=vmem, size = 0x12000, scoped, tag = 'internal scratch']
  #allocation2 [shape = 'f32[1,1]{1,0:T(1,128)S(1)}', space=vmem, size = 0x200, scoped, tag = 'scoped memory for tpu_custom_call.1']
  %s0 = inlined_call_operand.vmem [shape: f32[300,32], index: 0, kind: input, shape index: {}]
  %s1 = inlined_call_operand.vmem [shape: bf16[64,32], index: 1, kind: input, shape index: {}]
  %s2 = inlined_call_operand.vmem [shape: f32[64,1], index: 2, kind: input, shape index: {}]
  %s3 = inlined_call_operand.vmem [shape: bf16[32,64], index: 3, kind: input, shape index: {}]
  %s4 = inlined_call_operand.vmem [shape: f32[32,1], index: 4, kind: input, shape index: {}]
  %s5 = inlined_call_operand.vmem [shape: f32[32,1], index: 5, kind: input, shape index: {}]
  %s6 = inlined_call_operand.<no memory space> [shape: f32[1,1], index: 6, kind: input, shape index: {}]
  %s7 = inlined_call_operand.hbm [shape: f32[1,300], index: 7, kind: output, shape index: {}]
  %s8 = sld [smem:[#allocation0]]
  $region38: #{tpu_custom_call.1} parent=0
    _
  %s10 = ssub.s32 1, %s8
  %s11 = scalar_select 0, %s10, %s8
  %v12 = vstv %s6
  %13 = vst [vmem:[#allocation2] sm:$0x1] %v12
  $region1: #{tpu_custom_call.1} parent=0
    #allocation3 [shape = 'u8[2048]{0}', space=vmem, size = 0x800, scoped, tag = 'output window, operand 0, single buffered']
    #allocation4 [shape = 's32[1]{0}', space=sflag, size = 0x4, scoped, tag = 'scoped memory for tpu_custom_call.1']
    %14 = vsyncpa [#allocation4], 0
    // Predicated region
    $region2: #{tpu_custom_call.1} parent=1 // pred_check
      _
    $region3: #{tpu_custom_call.1} parent=1 // pred_check_branch
      %16 = sbr.rel (0) target = $region5
    $region4: #{tpu_custom_call.1} parent=1 // pred_region
      _
    $region5: #{tpu_custom_call.1} parent=1 // pred_fallthru
      _
    // Predicated region
    $region6: #{tpu_custom_call.1} parent=1 // pred_check
      _
    $region7: #{tpu_custom_call.1} parent=1 // pred_check_branch
      %18 = sbr.rel (0) target = $region9
    $region8: #{tpu_custom_call.1} parent=1 // pred_region
      _
    $region9: #{tpu_custom_call.1} parent=1 // pred_fallthru
      _
    // Predicated region
    $region10: #{tpu_custom_call.1} parent=1 // pred_check
      _
    $region11: #{tpu_custom_call.1} parent=1 // pred_check_branch
      %20 = sbr.rel (0) target = $region13
    $region12: #{tpu_custom_call.1} parent=1 // pred_region
      _
    $region13: #{tpu_custom_call.1} parent=1 // pred_fallthru
      _
    // Predicated region
    $region14: #{tpu_custom_call.1} parent=1 // pred_check
      _
    $region15: #{tpu_custom_call.1} parent=1 // pred_check_branch
      %22 = sbr.rel (0) target = $region17
    $region16: #{tpu_custom_call.1} parent=1 // pred_region
      _
    $region17: #{tpu_custom_call.1} parent=1 // pred_fallthru
      _
    // Predicated region
    $region18: #{tpu_custom_call.1} parent=1 // pred_check
      _
    $region19: #{tpu_custom_call.1} parent=1 // pred_check_branch
      %24 = sbr.rel (0) target = $region21
    $region20: #{tpu_custom_call.1} parent=1 // pred_region
      _
    $region21: #{tpu_custom_call.1} parent=1 // pred_fallthru
      _
    // Predicated region
    $region22: #{tpu_custom_call.1} parent=1 // pred_check
      _
    $region23: #{tpu_custom_call.1} parent=1 // pred_check_branch
      %26 = sbr.rel (0) target = $region25
    $region24: #{tpu_custom_call.1} parent=1 // pred_region
      _
    $region25: #{tpu_custom_call.1} parent=1 // pred_fallthru
      _
    // Predicated region
    $region26: #{tpu_custom_call.1} parent=1 // pred_check
      _
    $region27: #{tpu_custom_call.1} parent=1 // pred_check_branch
      %28 = sbr.rel (0) target = $region29
    $region28: #{tpu_custom_call.1} parent=1 // pred_region
      _
    $region29: #{tpu_custom_call.1} parent=1 // pred_fallthru
      _
    %v30 = vld [vmem:[%s0] sm:$0xff]
    %v31 = vld [vmem:[%s0 + $0x8] sm:$0xff]
    %v32 = vld [vmem:[%s0 + $0x10] sm:$0xff]
    %v33 = vld [vmem:[%s0 + $0x18] sm:$0xff]
    %v34 = vld [vmem:[%s0 + $0x20] sm:$0xff]
    %v35 = vld [vmem:[%s0 + $0x28] sm:$0xff]
    %v36 = vld [vmem:[%s0 + $0x30] sm:$0xff]
    %v37 = vld [vmem:[%s0 + $0x38] sm:$0xff]
    %v38 = vld [vmem:[%s0 + $0x40] sm:$0xff]
    %v39 = vld [vmem:[%s0 + $0x48] sm:$0xff]
    %v40 = vld [vmem:[%s0 + $0x50] sm:$0xff]
    %v41 = vld [vmem:[%s0 + $0x58] sm:$0xff]
    %v42 = vld [vmem:[%s0 + $0x60] sm:$0xff]
    %v43 = vld [vmem:[%s0 + $0x68] sm:$0xff]
    %v44 = vld [vmem:[%s0 + $0x70] sm:$0xff]
    %v45 = vld [vmem:[%s0 + $0x78] sm:$0xff]
    %v46 = vld [vmem:[%s0 + $0x80] sm:$0xff]
    %v47 = vld [vmem:[%s0 + $0x88] sm:$0xff]
    %v48 = vld [vmem:[%s0 + $0x90] sm:$0xff]
    %v49 = vld [vmem:[%s0 + $0x98] sm:$0xff]
    %v50 = vld [vmem:[%s0 + $0xa0] sm:$0xff]
    %v51 = vld [vmem:[%s0 + $0xa8] sm:$0xff]
    %v52 = vld [vmem:[%s0 + $0xb0] sm:$0xff]
    %v53 = vld [vmem:[%s0 + $0xb8] sm:$0xff]
    %v54 = vld [vmem:[%s0 + $0xc0] sm:$0xff]
    %v55 = vld [vmem:[%s0 + $0xc8] sm:$0xff]
    %v56 = vld [vmem:[%s0 + $0xd0] sm:$0xff]
    %v57 = vld [vmem:[%s0 + $0xd8] sm:$0xff]
    %v58 = vld [vmem:[%s0 + $0xe0] sm:$0xff]
    %v59 = vld [vmem:[%s0 + $0xe8] sm:$0xff]
    %v60 = vld [vmem:[%s0 + $0xf0] sm:$0xff]
    %v61 = vld [vmem:[%s0 + $0xf8] sm:$0xff]
    %v62 = vld [vmem:[%s0 + $0x100] sm:$0xff]
    %v63 = vld [vmem:[%s0 + $0x108] sm:$0xff]
    %v64 = vld [vmem:[%s0 + $0x110] sm:$0xff]
    %v65 = vld [vmem:[%s0 + $0x118] sm:$0xff]
    %v66 = vld [vmem:[%s0 + $0x120] sm:$0xff]
    %v67 = vld [vmem:[%s0 + $0x128] sm:$0xff]
    %v68 = vld [vmem:[%s0 + $0x130] sm:$0xff]
    %v69 = vld [vmem:[%s0 + $0x138] sm:$0xff]
    %v70 = vld [vmem:[%s0 + $0x140] sm:$0xff]
    %v71 = vld [vmem:[%s0 + $0x148] sm:$0xff]
    %v72 = vld [vmem:[%s0 + $0x150] sm:$0xff]
    %v73 = vld [vmem:[%s0 + $0x158] sm:$0xff]
    %v74 = vld [vmem:[%s0 + $0x160] sm:$0xff]
    %v75 = vld [vmem:[%s0 + $0x168] sm:$0xff]
    %v76 = vld [vmem:[%s0 + $0x170] sm:$0xff]
    %v77 = vld [vmem:[%s0 + $0x178] sm:$0xff]
    %v78 = vld [vmem:[%s0 + $0x180] sm:$0xff]
    %v79 = vld [vmem:[%s0 + $0x188] sm:$0xff]
    %v80 = vld [vmem:[%s0 + $0x190] sm:$0xff]
    %v81 = vld [vmem:[%s0 + $0x198] sm:$0xff]
    %v82 = vld [vmem:[%s0 + $0x1a0] sm:$0xff]
    %v83 = vld [vmem:[%s0 + $0x1a8] sm:$0xff]
    %v84 = vld [vmem:[%s0 + $0x1b0] sm:$0xff]
    %v85 = vld [vmem:[%s0 + $0x1b8] sm:$0xff]
    %v86 = vld [vmem:[%s0 + $0x1c0] sm:$0xff]
    %v87 = vld [vmem:[%s0 + $0x1c8] sm:$0xff]
    %v88 = vld [vmem:[%s0 + $0x1d0] sm:$0xff]
    %v89 = vld [vmem:[%s0 + $0x1d8] sm:$0xff]
    %v90 = vld [vmem:[%s0 + $0x1e0] sm:$0xff]
    %v91 = vld [vmem:[%s0 + $0x1e8] sm:$0xff]
    %v92 = vld [vmem:[%s0 + $0x1f0] sm:$0xff]
    %v93 = vld [vmem:[%s0 + $0x1f8] sm:$0xff]
    %v94 = vpack.c.bf16 %v31, %v30
    %v95 = vpack.c.bf16 %v33, %v32
    %v96 = vpack.c.bf16 %v35, %v34
    %v97 = vpack.c.bf16 %v37, %v36
    %v98 = vpack.c.bf16 %v39, %v38
    %v99 = vpack.c.bf16 %v41, %v40
    %v100 = vpack.c.bf16 %v43, %v42
    %v101 = vpack.c.bf16 %v45, %v44
    %v102 = vpack.c.bf16 %v47, %v46
    %v103 = vpack.c.bf16 %v49, %v48
    %v104 = vpack.c.bf16 %v51, %v50
    %v105 = vpack.c.bf16 %v53, %v52
    %v106 = vpack.c.bf16 %v55, %v54
    %v107 = vpack.c.bf16 %v57, %v56
    %v108 = vpack.c.bf16 %v59, %v58
    %v109 = vpack.c.bf16 %v61, %v60
    %v110 = vpack.c.bf16 %v63, %v62
    %v111 = vpack.c.bf16 %v65, %v64
    %v112 = vpack.c.bf16 %v67, %v66
    %v113 = vpack.c.bf16 %v69, %v68
    %v114 = vpack.c.bf16 %v71, %v70
    %v115 = vpack.c.bf16 %v73, %v72
    %v116 = vpack.c.bf16 %v75, %v74
    %v117 = vpack.c.bf16 %v77, %v76
    %v118 = vpack.c.bf16 %v79, %v78
    %v119 = vpack.c.bf16 %v81, %v80
    %v120 = vpack.c.bf16 %v83, %v82
    %v121 = vpack.c.bf16 %v85, %v84
    %v122 = vpack.c.bf16 %v87, %v86
    %v123 = vpack.c.bf16 %v89, %v88
    %v124 = vpack.c.bf16 %v91, %v90
    %v125 = vpack.c.bf16 %v93, %v92
    %v126 = vld [vmem:[%s1] sm:$0xf]
    %v127 = vld [vmem:[%s1 + $0x4] sm:$0xf]
    %v128 = vld [vmem:[%s1 + $0x8] sm:$0xf]
    %v129 = vld [vmem:[%s1 + $0xc] sm:$0xf]
    %v130 = vld [vmem:[%s1 + $0x10] sm:$0xf]
    %v131 = vld [vmem:[%s1 + $0x14] sm:$0xf]
    %v132 = vld [vmem:[%s1 + $0x18] sm:$0xf]
    %v133 = vld [vmem:[%s1 + $0x1c] sm:$0xf]
    %v134 = vld [vmem:[%s2] sm:$0xff]
    %v135 = vld [vmem:[%s2 + $0x8] sm:$0xff]
    %v136 = vld [vmem:[%s2 + $0x10] sm:$0xff]
    %v137 = vld [vmem:[%s2 + $0x18] sm:$0xff]
    %v138 = vld [vmem:[%s2 + $0x20] sm:$0xff]
    %v139 = vld [vmem:[%s2 + $0x28] sm:$0xff]
    %v140 = vld [vmem:[%s2 + $0x30] sm:$0xff]
    %v141 = vld [vmem:[%s2 + $0x38] sm:$0xff]
    %143 = vset.pattern.permute.xlu0 0
    %144 = vperm.xlu0 %143, %v134
    %v145 = vpop.permute.xlu0 %144
    %148 = vset.pattern.permute.xlu0 0
    %149 = vperm.xlu0 %148, %v135
    %v150 = vpop.permute.xlu0 %149
    %153 = vset.pattern.permute.xlu0 0
    %154 = vperm.xlu0 %153, %v136
    %v155 = vpop.permute.xlu0 %154
    %158 = vset.pattern.permute.xlu0 0
    %159 = vperm.xlu0 %158, %v137
    %v160 = vpop.permute.xlu0 %159
    %163 = vset.pattern.permute.xlu0 0
    %164 = vperm.xlu0 %163, %v138
    %v165 = vpop.permute.xlu0 %164
    %168 = vset.pattern.permute.xlu0 0
    %169 = vperm.xlu0 %168, %v139
    %v170 = vpop.permute.xlu0 %169
    %173 = vset.pattern.permute.xlu0 0
    %174 = vperm.xlu0 %173, %v140
    %v175 = vpop.permute.xlu0 %174
    %178 = vset.pattern.permute.xlu0 0
    %179 = vperm.xlu0 %178, %v141
    %v180 = vpop.permute.xlu0 %179
    %v190 = vunpack.c.l.b16 %v126
    %v191 = vunpack.c.l.b16 %v127
    %v192 = vunpack.c.l.b16 %v128
    %v193 = vunpack.c.l.b16 %v129
    %v194 = vunpack.c.l.b16 %v130
    %v195 = vunpack.c.l.b16 %v131
    %v196 = vunpack.c.l.b16 %v132
    %v197 = vunpack.c.l.b16 %v133
    %v198 = vpack.c.b16 %v191, %v190
    %v199 = vpack.c.b16 %v193, %v192
    %v200 = vpack.c.b16 %v195, %v194
    %v201 = vpack.c.b16 %v197, %v196
    %vm202 = vcmask 261120
    %v204 = vsel %vm202, %v198, 0
    %v207 = vsel %vm202, %v199, 0
    %v210 = vsel %vm202, %v200, 0
    %v213 = vsel %vm202, %v201, 0
    %v216 = vsel %vm202, %v94, 0
    %v219 = vsel %vm202, %v95, 0
    %v222 = vsel %vm202, %v96, 0
    %v225 = vsel %vm202, %v97, 0
    %v228 = vsel %vm202, %v98, 0
    %v231 = vsel %vm202, %v99, 0
    %v234 = vsel %vm202, %v100, 0
    %v237 = vsel %vm202, %v101, 0
    %v240 = vsel %vm202, %v102, 0
    %v243 = vsel %vm202, %v103, 0
    %v246 = vsel %vm202, %v104, 0
    %v249 = vsel %vm202, %v105, 0
    %v252 = vsel %vm202, %v106, 0
    %v255 = vsel %vm202, %v107, 0
    %v258 = vsel %vm202, %v108, 0
    %v261 = vsel %vm202, %v109, 0
    %v264 = vsel %vm202, %v110, 0
    %v267 = vsel %vm202, %v111, 0
    %v270 = vsel %vm202, %v112, 0
    %v273 = vsel %vm202, %v113, 0
    %v276 = vsel %vm202, %v114, 0
    %v279 = vsel %vm202, %v115, 0
    %v282 = vsel %vm202, %v116, 0
    %v285 = vsel %vm202, %v117, 0
    %v288 = vsel %vm202, %v118, 0
    %v291 = vsel %vm202, %v119, 0
    %v294 = vsel %vm202, %v120, 0
    %v297 = vsel %vm202, %v121, 0
    %v300 = vsel %vm202, %v122, 0
    %v303 = vsel %vm202, %v123, 0
    %v306 = vsel %vm202, %v124, 0
    %v309 = vsel %vm202, %v125, 0
    %311 = vmatprep.subr.bf16.mxu0 0
    %312 = vmatpush1.bf16.xpose.msra.mxu0 %v216
    %313 = vmatprep.subr.bf16.mxu0 0
    %314 = vmatpush1.bf16.xpose.msra.mxu0 %v219
    %315 = vmatprep.subr.bf16.mxu0 0
    %316 = vmatpush1.bf16.xpose.msra.mxu0 %v222
    %317 = vmatprep.subr.bf16.mxu0 0
    %318 = vmatpush1.bf16.xpose.msra.mxu0 %v225
    %319 = vmatprep.subr.bf16.mxu0 0
    %320 = vmatpush1.bf16.xpose.msra.mxu0 %v228
    %321 = vmatprep.subr.bf16.mxu0 0
    %322 = vmatpush1.bf16.xpose.msra.mxu0 %v231
    %323 = vmatprep.subr.bf16.mxu0 0
    %324 = vmatpush1.bf16.xpose.msra.mxu0 %v234
    %325 = vmatprep.subr.bf16.mxu0 0
    %326 = vmatpush1.bf16.xpose.msra.mxu0 %v237
    %327 = vmatprep.subr.bf16.mxu0 0
    %328 = vmatpush1.bf16.xpose.msra.mxu0 %v240
    %329 = vmatprep.subr.bf16.mxu0 0
    %330 = vmatpush1.bf16.xpose.msra.mxu0 %v243
    %331 = vmatprep.subr.bf16.mxu0 0
    %332 = vmatpush1.bf16.xpose.msra.mxu0 %v246
    %333 = vmatprep.subr.bf16.mxu0 0
    %334 = vmatpush1.bf16.xpose.msra.mxu0 %v249
    %335 = vmatprep.subr.bf16.mxu0 0
    %336 = vmatpush1.bf16.xpose.msra.mxu0 %v252
    %337 = vmatprep.subr.bf16.mxu0 0
    %338 = vmatpush1.bf16.xpose.msra.mxu0 %v255
    %339 = vmatprep.subr.bf16.mxu0 0
    %340 = vmatpush1.bf16.xpose.msra.mxu0 %v258
    %341 = vmatprep.subr.bf16.mxu0 0
    %342 = vmatpush1.bf16.xpose.msra.mxu0 %v261
    %343 = vmatprep.mubr.bf16.mxu0 0
    %344 = vmatmul.mubr.bf16.gmra.mrb[0].mxu0 %v204
    %v345 = vpop.f32.mrb[0].mxu0
    %v346 = vadd.f32 %v145, %v345
    %v347 = vpop.f32.mrb[0].mxu0
    %v348 = vadd.f32 %v145, %v347
    %v349 = vpop.f32.mrb[0].mxu0
    %v350 = vadd.f32 %v150, %v349
    %v351 = vpop.f32.mrb[0].mxu0
    %v352 = vadd.f32 %v150, %v351
    %353 = vmatprep.mubr.bf16.mxu0 0
    %354 = vmatmul.mubr.bf16.gmra.mrb[0].mxu0 %v207
    %v355 = vpop.f32.mrb[0].mxu0
    %v356 = vadd.f32 %v155, %v355
    %v357 = vpop.f32.mrb[0].mxu0
    %v358 = vadd.f32 %v155, %v357
    %v359 = vpop.f32.mrb[0].mxu0
    %v360 = vadd.f32 %v160, %v359
    %v361 = vpop.f32.mrb[0].mxu0
    %v362 = vadd.f32 %v160, %v361
    %363 = vmatprep.mubr.bf16.mxu0 0
    %364 = vmatmul.mubr.bf16.gmra.mrb[0].mxu0 %v210
    %v365 = vpop.f32.mrb[0].mxu0
    %v366 = vadd.f32 %v165, %v365
    %v367 = vpop.f32.mrb[0].mxu0
    %v368 = vadd.f32 %v165, %v367
    %v369 = vpop.f32.mrb[0].mxu0
    %v370 = vadd.f32 %v170, %v369
    %v371 = vpop.f32.mrb[0].mxu0
    %v372 = vadd.f32 %v170, %v371
    %373 = vmatprep.mubr.bf16.mxu0 0
    %374 = vmatmul.mubr.bf16.gmra.mrb[0].mxu0 %v213
    %v375 = vpop.f32.mrb[0].mxu0
    %v376 = vadd.f32 %v175, %v375
    %v377 = vpop.f32.mrb[0].mxu0
    %v378 = vadd.f32 %v175, %v377
    %v379 = vpop.f32.mrb[0].mxu0
    %v380 = vadd.f32 %v180, %v379
    %v381 = vpop.f32.mrb[0].mxu0
    %v382 = vadd.f32 %v180, %v381
    %383 = vdwg.mxu0
    %384 = vmatprep.subr.bf16.mxu0 0
    %385 = vmatpush1.bf16.xpose.msra.mxu0 %v264
    %386 = vmatprep.subr.bf16.mxu0 0
    %387 = vmatpush1.bf16.xpose.msra.mxu0 %v267
    %388 = vmatprep.subr.bf16.mxu0 0
    %389 = vmatpush1.bf16.xpose.msra.mxu0 %v270
    %390 = vmatprep.subr.bf16.mxu0 0
    %391 = vmatpush1.bf16.xpose.msra.mxu0 %v273
    %392 = vmatprep.subr.bf16.mxu0 0
    %393 = vmatpush1.bf16.xpose.msra.mxu0 %v276
    %394 = vmatprep.subr.bf16.mxu0 0
    %395 = vmatpush1.bf16.xpose.msra.mxu0 %v279
    %396 = vmatprep.subr.bf16.mxu0 0
    %397 = vmatpush1.bf16.xpose.msra.mxu0 %v282
    %398 = vmatprep.subr.bf16.mxu0 0
    %399 = vmatpush1.bf16.xpose.msra.mxu0 %v285
    %400 = vmatprep.subr.bf16.mxu0 0
    %401 = vmatpush1.bf16.xpose.msra.mxu0 %v288
    %402 = vmatprep.subr.bf16.mxu0 0
    %403 = vmatpush1.bf16.xpose.msra.mxu0 %v291
    %404 = vmatprep.subr.bf16.mxu0 0
    %405 = vmatpush1.bf16.xpose.msra.mxu0 %v294
    %406 = vmatprep.subr.bf16.mxu0 0
    %407 = vmatpush1.bf16.xpose.msra.mxu0 %v297
    %408 = vmatprep.subr.bf16.mxu0 0
    %409 = vmatpush1.bf16.xpose.msra.mxu0 %v300
    %410 = vmatprep.subr.bf16.mxu0 0
    %411 = vmatpush1.bf16.xpose.msra.mxu0 %v303
    %412 = vmatprep.subr.bf16.mxu0 0
    %413 = vmatpush1.bf16.xpose.msra.mxu0 %v306
    %414 = vmatprep.subr.bf16.mxu0 0
    %415 = vmatpush1.bf16.xpose.msra.mxu0 %v309
    %416 = vmatprep.mubr.bf16.mxu0 0
    %417 = vmatmul.mubr.bf16.gmra.mrb[0].mxu0 %v204
    %v418 = vpop.f32.mrb[0].mxu0
    %v419 = vadd.f32 %v145, %v418
    %v420 = vpop.f32.mrb[0].mxu0
    %v421 = vadd.f32 %v145, %v420
    %v422 = vpop.f32.mrb[0].mxu0
    %v423 = vadd.f32 %v150, %v422
    %v424 = vpop.f32.mrb[0].mxu0
    %v425 = vadd.f32 %v150, %v424
    %426 = vmatprep.mubr.bf16.mxu0 0
    %427 = vmatmul.mubr.bf16.gmra.mrb[0].mxu0 %v207
    %v428 = vpop.f32.mrb[0].mxu0
    %v429 = vadd.f32 %v155, %v428
    %v430 = vpop.f32.mrb[0].mxu0
    %v431 = vadd.f32 %v155, %v430
    %v432 = vpop.f32.mrb[0].mxu0
    %v433 = vadd.f32 %v160, %v432
    %v434 = vpop.f32.mrb[0].mxu0
    %v435 = vadd.f32 %v160, %v434
    %436 = vmatprep.mubr.bf16.mxu0 0
    %437 = vmatmul.mubr.bf16.gmra.mrb[0].mxu0 %v210
    %v438 = vpop.f32.mrb[0].mxu0
    %v439 = vadd.f32 %v165, %v438
    %v440 = vpop.f32.mrb[0].mxu0
    %v441 = vadd.f32 %v165, %v440
    %v442 = vpop.f32.mrb[0].mxu0
    %v443 = vadd.f32 %v170, %v442
    %v444 = vpop.f32.mrb[0].mxu0
    %v445 = vadd.f32 %v170, %v444
    %446 = vmatprep.mubr.bf16.mxu0 0
    %447 = vmatmul.mubr.bf16.gmra.mrb[0].mxu0 %v213
    %v448 = vpop.f32.mrb[0].mxu0
    %v449 = vadd.f32 %v175, %v448
    %v450 = vpop.f32.mrb[0].mxu0
    %v451 = vadd.f32 %v175, %v450
    %v452 = vpop.f32.mrb[0].mxu0
    %v453 = vadd.f32 %v180, %v452
    %v454 = vpop.f32.mrb[0].mxu0
    %v455 = vadd.f32 %v180, %v454
    %456 = vdwg.mxu0
    %v457 = vmax.f32 %v346, 0.0
    %v458 = vmax.f32 %v348, 0.0
    %v459 = vmax.f32 %v419, 0.0
    %v460 = vmax.f32 %v421, 0.0
    %v461 = vmax.f32 %v350, 0.0
    %v462 = vmax.f32 %v352, 0.0
    %v463 = vmax.f32 %v423, 0.0
    %v464 = vmax.f32 %v425, 0.0
    %v465 = vmax.f32 %v356, 0.0
    %v466 = vmax.f32 %v358, 0.0
    %v467 = vmax.f32 %v429, 0.0
    %v468 = vmax.f32 %v431, 0.0
    %v469 = vmax.f32 %v360, 0.0
    %v470 = vmax.f32 %v362, 0.0
    %v471 = vmax.f32 %v433, 0.0
    %v472 = vmax.f32 %v435, 0.0
    %v473 = vmax.f32 %v366, 0.0
    %v474 = vmax.f32 %v368, 0.0
    %v475 = vmax.f32 %v439, 0.0
    %v476 = vmax.f32 %v441, 0.0
    %v477 = vmax.f32 %v370, 0.0
    %v478 = vmax.f32 %v372, 0.0
    %v479 = vmax.f32 %v443, 0.0
    %v480 = vmax.f32 %v445, 0.0
    %v481 = vmax.f32 %v376, 0.0
    %v482 = vmax.f32 %v378, 0.0
    %v483 = vmax.f32 %v449, 0.0
    %v484 = vmax.f32 %v451, 0.0
    %v485 = vmax.f32 %v380, 0.0
    %v486 = vmax.f32 %v382, 0.0
    %v487 = vmax.f32 %v453, 0.0
    %v488 = vmax.f32 %v455, 0.0
    %v489 = vld [vmem:[%s3] sm:$0xf]
    %v490 = vld [vmem:[%s3 + $0x4] sm:$0xf]
    %v491 = vld [vmem:[%s3 + $0x8] sm:$0xf]
    %v492 = vld [vmem:[%s3 + $0xc] sm:$0xf]
    %v493 = vpack.c.bf16 %v461, %v457
    %v494 = vpack.c.bf16 %v462, %v458
    %v495 = vpack.c.bf16 %v463, %v459
    %v496 = vpack.c.bf16 %v464, %v460
    %v497 = vpack.c.bf16 %v469, %v465
    %v498 = vpack.c.bf16 %v470, %v466
    %v499 = vpack.c.bf16 %v471, %v467
    %v500 = vpack.c.bf16 %v472, %v468
    %v501 = vpack.c.bf16 %v477, %v473
    %v502 = vpack.c.bf16 %v478, %v474
    %v503 = vpack.c.bf16 %v479, %v475
    %v504 = vpack.c.bf16 %v480, %v476
    %v505 = vpack.c.bf16 %v485, %v481
    %v506 = vpack.c.bf16 %v486, %v482
    %v507 = vpack.c.bf16 %v487, %v483
    %v508 = vpack.c.bf16 %v488, %v484
    %v509 = vld [vmem:[%s4] sm:$0xff]
    %v510 = vld [vmem:[%s4 + $0x8] sm:$0xff]
    %v511 = vld [vmem:[%s4 + $0x10] sm:$0xff]
    %v512 = vld [vmem:[%s4 + $0x18] sm:$0xff]
    %514 = vset.pattern.permute.xlu0 0
    %515 = vperm.xlu0 %514, %v509
    %v516 = vpop.permute.xlu0 %515
    %519 = vset.pattern.permute.xlu0 0
    %520 = vperm.xlu0 %519, %v510
    %v521 = vpop.permute.xlu0 %520
    %524 = vset.pattern.permute.xlu0 0
    %525 = vperm.xlu0 %524, %v511
    %v526 = vpop.permute.xlu0 %525
    %529 = vset.pattern.permute.xlu0 0
    %530 = vperm.xlu0 %529, %v512
    %v531 = vpop.permute.xlu0 %530
    %v537 = vunpack.c.l.b16 %v489
    %v538 = vunpack.c.l.b16 %v490
    %v539 = vunpack.c.l.b16 %v491
    %v540 = vunpack.c.l.b16 %v492
    %v541 = vpack.c.b16 %v538, %v537
    %v542 = vpack.c.b16 %v540, %v539
    %vm543 = vcmask 523264
    %v545 = vsel %vm543, %v541, 0
    %v548 = vsel %vm543, %v542, 0
    %550 = vmatprep.subr.bf16.mxu0 %v494
    %551 = vmatpush1.bf16.msra.mxu0 %v493
    %552 = vmatprep.subr.bf16.mxu0 %v498
    %553 = vmatpush1.bf16.msra.mxu0 %v497
    %554 = vmatprep.subr.bf16.mxu0 %v502
    %555 = vmatpush1.bf16.msra.mxu0 %v501
    %556 = vmatprep.subr.bf16.mxu0 %v506
    %557 = vmatpush1.bf16.msra.mxu0 %v505
    %558 = vmatprep.subr.bf16.mxu0 0
    %559 = vmatpush1.bf16.msra.mxu0 0
    %560 = vmatprep.subr.bf16.mxu0 0
    %561 = vmatpush1.bf16.msra.mxu0 0
    %562 = vmatprep.subr.bf16.mxu0 0
    %563 = vmatpush1.bf16.msra.mxu0 0
    %564 = vmatprep.subr.bf16.mxu0 0
    %565 = vmatpush1.bf16.msra.mxu0 0
    %566 = vmatprep.subr.bf16.mxu0 0
    %567 = vmatpush1.bf16.msra.mxu0 0
    %568 = vmatprep.subr.bf16.mxu0 0
    %569 = vmatpush1.bf16.msra.mxu0 0
    %570 = vmatprep.subr.bf16.mxu0 0
    %571 = vmatpush1.bf16.msra.mxu0 0
    %572 = vmatprep.subr.bf16.mxu0 0
    %573 = vmatpush1.bf16.msra.mxu0 0
    %574 = vmatprep.subr.bf16.mxu0 0
    %575 = vmatpush1.bf16.msra.mxu0 0
    %576 = vmatprep.subr.bf16.mxu0 0
    %577 = vmatpush1.bf16.msra.mxu0 0
    %578 = vmatprep.subr.bf16.mxu0 0
    %579 = vmatpush1.bf16.msra.mxu0 0
    %580 = vmatprep.subr.bf16.mxu0 0
    %581 = vmatpush1.bf16.msra.mxu0 0
    %582 = vmatprep.mubr.bf16.mxu0 0
    %583 = vmatmul.mubr.bf16.gmra.mrb[0].mxu0 %v545
    %v584 = vpop.f32.mrb[0].mxu0
    %v585 = vadd.f32 %v516, %v584
    %v586 = vpop.f32.mrb[0].mxu0
    %v587 = vadd.f32 %v516, %v586
    %v588 = vpop.f32.mrb[0].mxu0
    %v589 = vadd.f32 %v521, %v588
    %v590 = vpop.f32.mrb[0].mxu0
    %v591 = vadd.f32 %v521, %v590
    %592 = vmatprep.mubr.bf16.mxu0 0
    %593 = vmatmul.mubr.bf16.gmra.mrb[0].mxu0 %v548
    %v594 = vpop.f32.mrb[0].mxu0
    %v595 = vadd.f32 %v526, %v594
    %v596 = vpop.f32.mrb[0].mxu0
    %v597 = vadd.f32 %v526, %v596
    %v598 = vpop.f32.mrb[0].mxu0
    %v599 = vadd.f32 %v531, %v598
    %v600 = vpop.f32.mrb[0].mxu0
    %v601 = vadd.f32 %v531, %v600
    %602 = vdwg.mxu0
    %603 = vmatprep.subr.bf16.mxu0 %v496
    %604 = vmatpush1.bf16.msra.mxu0 %v495
    %605 = vmatprep.subr.bf16.mxu0 %v500
    %606 = vmatpush1.bf16.msra.mxu0 %v499
    %607 = vmatprep.subr.bf16.mxu0 %v504
    %608 = vmatpush1.bf16.msra.mxu0 %v503
    %609 = vmatprep.subr.bf16.mxu0 %v508
    %610 = vmatpush1.bf16.msra.mxu0 %v507
    %611 = vmatprep.subr.bf16.mxu0 0
    %612 = vmatpush1.bf16.msra.mxu0 0
    %613 = vmatprep.subr.bf16.mxu0 0
    %614 = vmatpush1.bf16.msra.mxu0 0
    %615 = vmatprep.subr.bf16.mxu0 0
    %616 = vmatpush1.bf16.msra.mxu0 0
    %617 = vmatprep.subr.bf16.mxu0 0
    %618 = vmatpush1.bf16.msra.mxu0 0
    %619 = vmatprep.subr.bf16.mxu0 0
    %620 = vmatpush1.bf16.msra.mxu0 0
    %621 = vmatprep.subr.bf16.mxu0 0
    %622 = vmatpush1.bf16.msra.mxu0 0
    %623 = vmatprep.subr.bf16.mxu0 0
    %624 = vmatpush1.bf16.msra.mxu0 0
    %625 = vmatprep.subr.bf16.mxu0 0
    %626 = vmatpush1.bf16.msra.mxu0 0
    %627 = vmatprep.subr.bf16.mxu0 0
    %628 = vmatpush1.bf16.msra.mxu0 0
    %629 = vmatprep.subr.bf16.mxu0 0
    %630 = vmatpush1.bf16.msra.mxu0 0
    %631 = vmatprep.subr.bf16.mxu0 0
    %632 = vmatpush1.bf16.msra.mxu0 0
    %633 = vmatprep.subr.bf16.mxu0 0
    %634 = vmatpush1.bf16.msra.mxu0 0
    %635 = vmatprep.mubr.bf16.mxu0 0
    %636 = vmatmul.mubr.bf16.gmra.mrb[0].mxu0 %v545
    %v637 = vpop.f32.mrb[0].mxu0
    %v638 = vadd.f32 %v516, %v637
    %v639 = vpop.f32.mrb[0].mxu0
    %v640 = vadd.f32 %v516, %v639
    %v641 = vpop.f32.mrb[0].mxu0
    %v642 = vadd.f32 %v521, %v641
    %v643 = vpop.f32.mrb[0].mxu0
    %v644 = vadd.f32 %v521, %v643
    %645 = vmatprep.mubr.bf16.mxu0 0
    %646 = vmatmul.mubr.bf16.gmra.mrb[0].mxu0 %v548
    %v647 = vpop.f32.mrb[0].mxu0
    %v648 = vadd.f32 %v526, %v647
    %v649 = vpop.f32.mrb[0].mxu0
    %v650 = vadd.f32 %v526, %v649
    %v651 = vpop.f32.mrb[0].mxu0
    %v652 = vadd.f32 %v531, %v651
    %v653 = vpop.f32.mrb[0].mxu0
    %v654 = vadd.f32 %v531, %v653
    %655 = vdwg.mxu0
    %v656 = vmax.f32 %v585, 0.0
    %v657 = vmax.f32 %v587, 0.0
    %v658 = vmax.f32 %v638, 0.0
    %v659 = vmax.f32 %v640, 0.0
    %v660 = vmax.f32 %v589, 0.0
    %v661 = vmax.f32 %v591, 0.0
    %v662 = vmax.f32 %v642, 0.0
    %v663 = vmax.f32 %v644, 0.0
    %v664 = vmax.f32 %v595, 0.0
    %v665 = vmax.f32 %v597, 0.0
    %v666 = vmax.f32 %v648, 0.0
    %v667 = vmax.f32 %v650, 0.0
    %v668 = vmax.f32 %v599, 0.0
    %v669 = vmax.f32 %v601, 0.0
    %v670 = vmax.f32 %v652, 0.0
    %v671 = vmax.f32 %v654, 0.0
    %v672 = vld [vmem:[%s5] sm:$0xff]
    %v673 = vld [vmem:[%s5 + $0x8] sm:$0xff]
    %v674 = vld [vmem:[%s5 + $0x10] sm:$0xff]
    %v675 = vld [vmem:[%s5 + $0x18] sm:$0xff]
    %677 = vset.pattern.permute.xlu0 0
    %678 = vperm.xlu0 %677, %v672
    %v679 = vpop.permute.xlu0 %678
    %682 = vset.pattern.permute.xlu0 0
    %683 = vperm.xlu0 %682, %v673
    %v684 = vpop.permute.xlu0 %683
    %687 = vset.pattern.permute.xlu0 0
    %688 = vperm.xlu0 %687, %v674
    %v689 = vpop.permute.xlu0 %688
    %692 = vset.pattern.permute.xlu0 0
    %693 = vperm.xlu0 %692, %v675
    %v694 = vpop.permute.xlu0 %693
    %v696 = vmul.f32 %v656, %v679
    %v697 = vmul.f32 %v657, %v679
    %v698 = vmul.f32 %v658, %v679
    %v699 = vmul.f32 %v659, %v679
    %v700 = vmul.f32 %v660, %v684
    %v701 = vmul.f32 %v661, %v684
    %v702 = vmul.f32 %v662, %v684
    %v703 = vmul.f32 %v663, %v684
    %v704 = vmul.f32 %v664, %v689
    %v705 = vmul.f32 %v665, %v689
    %v706 = vmul.f32 %v666, %v689
    %v707 = vmul.f32 %v667, %v689
    %v708 = vmul.f32 %v668, %v694
    %v709 = vmul.f32 %v669, %v694
    %v710 = vmul.f32 %v670, %v694
    %v711 = vmul.f32 %v671, %v694
    %v712 = vadd.f32 %v696, %v700
    %v713 = vadd.f32 %v712, %v704
    %v714 = vadd.f32 %v713, %v708
    %v715 = vrot.slane %v714, 4
    %v716 = vadd.f32 %v714, %v715
    %v717 = vrot.slane %v716, 2
    %v718 = vadd.f32 %v716, %v717
    %v719 = vrot.slane %v718, 1
    %v720 = vadd.f32 %v718, %v719
    %v721 = vadd.f32 %v697, %v701
    %v722 = vadd.f32 %v721, %v705
    %v723 = vadd.f32 %v722, %v709
    %v724 = vrot.slane %v723, 4
    %v725 = vadd.f32 %v723, %v724
    %v726 = vrot.slane %v725, 2
    %v727 = vadd.f32 %v725, %v726
    %v728 = vrot.slane %v727, 1
    %v729 = vadd.f32 %v727, %v728
    %v730 = vadd.f32 %v698, %v702
    %v731 = vadd.f32 %v730, %v706
    %v732 = vadd.f32 %v731, %v710
    %v733 = vrot.slane %v732, 4
    %v734 = vadd.f32 %v732, %v733
    %v735 = vrot.slane %v734, 2
    %v736 = vadd.f32 %v734, %v735
    %v737 = vrot.slane %v736, 1
    %v738 = vadd.f32 %v736, %v737
    %v739 = vadd.f32 %v699, %v703
    %v740 = vadd.f32 %v739, %v707
    %v741 = vadd.f32 %v740, %v711
    %v742 = vrot.slane %v741, 4
    %v743 = vadd.f32 %v741, %v742
    %v744 = vrot.slane %v743, 2
    %v745 = vadd.f32 %v743, %v744
    %v746 = vrot.slane %v745, 1
    %v747 = vadd.f32 %v745, %v746
    %v748 = vld [vmem:[#allocation2] sm:$0x1]
    %750 = vset.pattern.permute.xlu0 0
    %751 = vperm.xlu0 %750, %v748
    %v752 = vpop.permute.xlu0 %751
    %v754 = vlaneseq
    %v755 = vshrl.u32 %v754, 7
    %v756 = vsub.s32 0, %v755
    %v757 = vrot.slane %v752, %v756
    %v758 = vadd.f32 %v720, %v757
    %v759 = vadd.f32 %v729, %v757
    %v760 = vadd.f32 %v738, %v757
    %v761 = vadd.f32 %v747, %v757
    %v766 = vcombine.low %v758, %v759
    %v767 = vcombine.low %v760, %v761
    %v769 = vunpack.c.l.s4 1966171168
    %v770 = vunpack.c.0.s8 %v769
    %v771 = vlaneseq
    %v772 = vshrl.u32 %v771, 7
    %v773 = vsub.s32 %v770, %v772
    %v774 = vrot.slane %v766, %v773
    %v776 = vunpack.c.l.s4 1966171168
    %v777 = vunpack.c.0.s8 %v776
    %v778 = vlaneseq
    %v779 = vshrl.u32 %v778, 7
    %v780 = vsub.s32 %v777, %v779
    %v781 = vrot.slane %v767, %v780
    %v782 = vcombine.low %v774, %v781
    %v784 = vunpack.c.l.s4 1966171168
    %v785 = vunpack.c.0.s8 %v784
    %v786 = vlaneseq
    %v787 = vshrl.u32 %v786, 7
    %v788 = vsub.s32 %v785, %v787
    %v789 = vrot.slane %v782, %v788
    %v791 = vlaneseq
    %vm792 = vcmp.ge.s32.totalorder %v791, 0
    %vm793 = vcmp.lt.s32.totalorder %v791, 512
    %vm794 = vmand %vm792, %vm793
    %795 = vst.msk [vmem:[#allocation3] sm:$0xf] %vm794, %v789
    // Predicated region
    $region30: #{tpu_custom_call.1} parent=1 // pred_check
      _
    $region31: #{tpu_custom_call.1} parent=1 // pred_check_branch
      %797 = sbr.rel (0) target = $region33
    $region32: #{tpu_custom_call.1} parent=1 // pred_region
      %s799 = ssub.s32 64, 48
      %800 = vsyncadd [#allocation4], %s799
      %s802 = sshll.u32 [#allocation3], 4
      %s803 = int_to_ptr.vmem [resolvable:$true] %s802
      %805 = dma.vmem_to_hbm [thread:$0]  %s803, 48, %s7, [#allocation4]
    $region33: #{tpu_custom_call.1} parent=1 // pred_fallthru
      _
    // Predicated region
    $region34: #{tpu_custom_call.1} parent=1 // pred_check
      _
    $region35: #{tpu_custom_call.1} parent=1 // pred_check_branch
      %807 = sbr.rel (0) target = $region37
    $region36: #{tpu_custom_call.1} parent=1 // pred_region
      %808 = dma.done [#allocation4], 64
    $region37: #{tpu_custom_call.1} parent=1 // pred_fallthru
      _
    %809 = vsyncpa [#allocation4], 1

</llo_original>
